<compile_context>
chip_gen: v7x
topology: tpu7x:2x2x1
jax: 0.10.0
libtpu: 0.0.40
codegen_flags: <defaults>
</compile_context>

<pallas_src>
import math

import jax
import jax.numpy as jnp
from jax.experimental import pallas as pl
from jax.experimental.pallas import tpu as pltpu


# ----------------------------- in-kernel helpers -----------------------------

_SQRT_2_OVER_PI = 0.7978845608028654


def _gelu_tanh(x):
    # tanh-form GELU: 0.5*x*(1 + tanh(sqrt(2/pi)*(x + 0.044715*x^3))).
    # The tanh runs on the EUP (separate bundle slot), keeping the VALU light;
    # max abs deviation from the exact erf GELU is ~5e-4.
    inner = _SQRT_2_OVER_PI * x * (1.0 + 0.044715 * x * x)
    return 0.5 * x * (1.0 + jnp.tanh(inner))


# --------------------------------- kernel ------------------------------------

def ffn_kernel(x_ref, w1_ref, b1_ref, w2_ref, b2_ref, o_ref):
    """One row-tile of the FFN: y = GELU(x @ W1 + b1) @ W2 + b2."""
    x = x_ref[...]                                    # (TR, Dp) bf16
    w1 = w1_ref[...]                                  # (Dp, Hp) bf16 (resident)
    b1 = b1_ref[...]                                  # (1, Hp)  f32
    w2 = w2_ref[...]                                  # (Hp, Dp) bf16 (resident)
    b2 = b2_ref[...]                                  # (1, Dp)  f32

    # bf16 x bf16 on the MXU with f32 accumulation; bias add + GELU in f32.
    h = jnp.dot(x, w1, preferred_element_type=jnp.float32) + b1   # (TR, Hp)
    h = _gelu_tanh(h)
    # Dropout(p=0.0) -> identity.
    y = jnp.dot(h.astype(jnp.bfloat16), w2,
                preferred_element_type=jnp.float32) + b2          # (TR, Dp)
    o_ref[...] = y.astype(o_ref.dtype)


# -------------------------------- wrapper ------------------------------------

def _round_up(x, m):
    return (x + m - 1) // m * m


def prepare_ffn_params(w1, b1, w2, b2):
    """Pad weights/biases to lane-dense (x128) shapes and cast weights to bf16.

    Call once and reuse: hoists the f32->bf16 cast and zero-pad HBM traffic out
    of the hot path.  Zero-padding is exact for this FFN: padded inputs/weights/
    biases are zero and GELU(0) == 0, so padded lanes contribute nothing.
    """
    D, H = w1.shape
    Dp, Hp = _round_up(D, 128), _round_up(H, 128)
    w1p = jnp.zeros((Dp, Hp), jnp.bfloat16).at[:D, :H].set(w1.astype(jnp.bfloat16))
    b1p = jnp.zeros((1, Hp), jnp.float32).at[:, :H].set(
        b1.reshape(1, H).astype(jnp.float32))
    w2p = jnp.zeros((Hp, Dp), jnp.bfloat16).at[:H, :D].set(w2.astype(jnp.bfloat16))
    b2p = jnp.zeros((1, Dp), jnp.float32).at[:, :D].set(
        b2.reshape(1, D).astype(jnp.float32))
    return {"w1": w1p, "b1": b1p, "w2": w2p, "b2": b2p, "dim": D, "hidden": H}


def _vmem_limit_bytes(tr, Dp, Hp):
    weights = 2 * Dp * Hp * 2              # bf16 W1 + W2, single-buffered
    biases = (Hp + Dp) * 4                 # f32 biases
    x_tiles = 2 * tr * Dp * 2              # bf16 input tile, double-buffered
    o_tiles = 2 * tr * Dp * 4              # f32 output tile, double-buffered
    hidden = 3 * tr * Hp * 4               # f32 hidden acts + GELU temporaries
    need = weights + biases + x_tiles + o_tiles + hidden
    # Generous headroom, but stay under v7x's 64 MiB physical VMEM.
    return min(int(need * 1.5) + (4 << 20), 56 << 20)


def feed_forward(x, params, *, tile_rows=256):
    """Apply the FFN.  x: (..., D).  params: output of prepare_ffn_params.

    tile_rows=256 fits v7x's 64 MiB VMEM at real ViT sizes; raise to 512 on
    v5e/v6e (128 MiB VMEM) for fewer grid steps if desired.
    """
    D, H = params["dim"], params["hidden"]
    w1p, b1p, w2p, b2p = params["w1"], params["b1"], params["w2"], params["b2"]
    Dp, Hp = w1p.shape
    orig_shape = x.shape
    assert orig_shape[-1] == D
    rows = math.prod(orig_shape[:-1])

    # Row tiling: balanced tiles (multiple of 8 sublanes).  Force >= 2 grid
    # steps whenever there are > 8 rows so v7x's two TensorCores both get work.
    n_tiles = max(pl.cdiv(rows, tile_rows), 1)
    if n_tiles < 2 and rows > 8:
        n_tiles = 2
    tr = _round_up((rows + n_tiles - 1) // n_tiles, 8)
    rows_pad = tr * n_tiles

    x2 = x.reshape(rows, D)
    if rows_pad == rows and Dp == D:
        x_in = x2.astype(jnp.bfloat16)        # no pad copy needed (128-aligned D)
    else:
        x_in = jnp.zeros((rows_pad, Dp), jnp.bfloat16).at[:rows, :D].set(
            x2.astype(jnp.bfloat16))

    cost = pl.CostEstimate(
        flops=2 * rows_pad * Dp * Hp * 2,                 # two matmuls
        transcendentals=rows_pad * Hp,                    # tanh inside GELU
        bytes_accessed=(2 * rows_pad * Dp                 # bf16 x in
                        + 4 * rows_pad * Dp               # f32 y out
                        + 2 * (Dp * Hp + Hp * Dp)         # bf16 weights
                        + 4 * (Hp + Dp)),                 # f32 biases
    )

    def run(single_buffer_weights):
        def resident(shape):
            # Constant block index across the whole grid -> never re-fetched;
            # single-buffering halves its VMEM footprint.
            if single_buffer_weights:
                return pl.BlockSpec(shape, lambda i: (0, 0),
                                    pipeline_mode=pl.Buffered(1))
            return pl.BlockSpec(shape, lambda i: (0, 0))

        return pl.pallas_call(
            ffn_kernel,
            out_shape=jax.ShapeDtypeStruct((rows_pad, Dp), jnp.float32),
            grid=(n_tiles,),
            in_specs=[
                pl.BlockSpec((tr, Dp), lambda i: (i, 0)),     # activation tile
                resident((Dp, Hp)),                           # W1 resident
                resident((1, Hp)),                            # b1 resident
                resident((Hp, Dp)),                           # W2 resident
                resident((1, Dp)),                            # b2 resident
            ],
            out_specs=pl.BlockSpec((tr, Dp), lambda i: (i, 0)),
            compiler_params=pltpu.CompilerParams(
                dimension_semantics=("parallel",),
                vmem_limit_bytes=_vmem_limit_bytes(tr, Dp, Hp)),
            cost_estimate=cost,
        )(x_in, w1p, b1p, w2p, b2p)

    if hasattr(pl, "Buffered"):
        try:
            out = run(True)
        except Exception:  # pragma: no cover - fall back if Buffered(1) unsupported
            out = run(False)
    else:
        out = run(False)

    return out[:rows, :D].reshape(orig_shape)


# ---------------------------- deterministic init ------------------------------

def init_ffn_params(key, dim, hidden_dim):
    k1, k2, k3, k4 = jax.random.split(key, 4)
    a1 = 1.0 / math.sqrt(dim)
    a2 = 1.0 / math.sqrt(hidden_dim)
    return {
        # Stored as (in, out): kernel computes x @ W + b (== PyTorch x @ W.T + b
        # under our own deterministic init).
        "w1": jax.random.uniform(k1, (dim, hidden_dim), jnp.float32, -a1, a1),
        "b1": jax.random.uniform(k2, (hidden_dim,), jnp.float32, -a1, a1),
        "w2": jax.random.uniform(k3, (hidden_dim, dim), jnp.float32, -a2, a2),
        "b2": jax.random.uniform(k4, (dim,), jnp.float32, -a2, a2),
    }


# ------------------------------ reference (JAX) --------------------------------

def _ref_ffn(x, p):
    h = x @ p["w1"] + p["b1"]
    h = jax.nn.gelu(h, approximate=False)   # torch.nn.GELU() default (erf form)
    return h @ p["w2"] + p["b2"]            # Dropout(0.0) == identity


# ---------------------------------- main ---------------------------------------

if __name__ == "__main__":
    # Small shapes consistent with the ViT FeedForward usage: (B, N, dim), hidden.
    B, N, DIM, HIDDEN = 2, 8, 32, 64

    root = jax.random.PRNGKey(0)
    kx, kp, kx2 = jax.random.split(root, 3)
    x = jax.random.normal(kx, (B, N, DIM), jnp.float32)
    params = init_ffn_params(kp, DIM, HIDDEN)
    prepared = prepare_ffn_params(params["w1"], params["b1"],
                                  params["w2"], params["b2"])

    out = jax.block_until_ready(feed_forward(x, prepared))
    ref = _ref_ffn(x, params)
    assert out.shape == (B, N, DIM)
    # bf16 MXU operands + tanh-form GELU -> relaxed tolerance vs f32 erf reference.
    err = float(jnp.max(jnp.abs(out - ref)))
    assert err < 2e-2, err

    # Second check exercising the multi-tile row grid (rows > tile_rows, non-multiple).
    x_big = jax.random.normal(kx2, (4, 197, DIM), jnp.float32)
    out_big = jax.block_until_ready(feed_forward(x_big, prepared))
    ref_big = _ref_ffn(x_big, params)
    err_big = float(jnp.max(jnp.abs(out_big - ref_big)))
    assert err_big < 2e-2, err_big

    print("KERNEL_OK")
</pallas_src>

<mosaic_0001>
module attributes {stable_mosaic.version = 11 : i64} {
  func.func @ffn_kernel(%arg0: i32, %arg1: memref<8x128xbf16, #tpu.memory_space<vmem>>, %arg2: memref<128x128xbf16, #tpu.memory_space<vmem>>, %arg3: memref<1x128xf32, #tpu.memory_space<vmem>>, %arg4: memref<128x128xbf16, #tpu.memory_space<vmem>>, %arg5: memref<1x128xf32, #tpu.memory_space<vmem>>, %arg6: memref<8x128xf32, #tpu.memory_space<vmem>>) attributes {dimension_semantics = [#tpu.dimension_semantics<parallel>], iteration_bounds = array<i64: 2>, scalar_prefetch = 0 : i64, scratch_operands = 0 : i64, tpu.core_type = #tpu.core_type<tc>, window_params = [{transform_indices = @transform_0, window_bounds = array<i64: 8, 128>}, {pipeline_mode = #tpu.pipeline_mode<synchronous>, transform_indices = @transform_1, window_bounds = array<i64: 128, 128>}, {pipeline_mode = #tpu.pipeline_mode<synchronous>, transform_indices = @transform_2, window_bounds = array<i64: 1, 128>}, {pipeline_mode = #tpu.pipeline_mode<synchronous>, transform_indices = @transform_3, window_bounds = array<i64: 128, 128>}, {pipeline_mode = #tpu.pipeline_mode<synchronous>, transform_indices = @transform_4, window_bounds = array<i64: 1, 128>}, {transform_indices = @transform_5, window_bounds = array<i64: 8, 128>}]} {
    %c0 = arith.constant 0 : index
    %c0_0 = arith.constant 0 : index
    %0 = vector.load %arg1[%c0, %c0_0] : memref<8x128xbf16, #tpu.memory_space<vmem>>, vector<8x128xbf16>
    %c0_1 = arith.constant 0 : index
    %c0_2 = arith.constant 0 : index
    %1 = vector.load %arg2[%c0_1, %c0_2] : memref<128x128xbf16, #tpu.memory_space<vmem>>, vector<128x128xbf16>
    %c0_3 = arith.constant 0 : index
    %c0_4 = arith.constant 0 : index
    %2 = vector.load %arg3[%c0_3, %c0_4] : memref<1x128xf32, #tpu.memory_space<vmem>>, vector<1x128xf32>
    %c0_5 = arith.constant 0 : index
    %c0_6 = arith.constant 0 : index
    %3 = vector.load %arg4[%c0_5, %c0_6] : memref<128x128xbf16, #tpu.memory_space<vmem>>, vector<128x128xbf16>
    %c0_7 = arith.constant 0 : index
    %c0_8 = arith.constant 0 : index
    %4 = vector.load %arg5[%c0_7, %c0_8] : memref<1x128xf32, #tpu.memory_space<vmem>>, vector<1x128xf32>
    %cst = arith.constant dense<0.000000e+00> : vector<8x128xf32>
    %5 = tpu.matmul %0, %1, %cst {dimension_numbers = #tpu.dot_dimension_numbers<[1], [0], [0], [1], [0, 0, 1, 1], [], []>} : vector<8x128xbf16>, vector<128x128xbf16>, vector<8x128xf32> -> vector<8x128xf32>
    %6 = vector.broadcast %2 : vector<1x128xf32> to vector<8x128xf32>
    %7 = arith.addf %5, %6 : vector<8x128xf32>
    %cst_9 = arith.constant 0.797884583 : f32
    %8 = vector.broadcast %cst_9 : f32 to vector<8x128xf32>
    %9 = arith.mulf %8, %7 : vector<8x128xf32>
    %cst_10 = arith.constant 4.471500e-02 : f32
    %10 = vector.broadcast %cst_10 : f32 to vector<8x128xf32>
    %11 = arith.mulf %10, %7 : vector<8x128xf32>
    %12 = arith.mulf %11, %7 : vector<8x128xf32>
    %cst_11 = arith.constant 1.000000e+00 : f32
    %13 = vector.broadcast %cst_11 : f32 to vector<8x128xf32>
    %14 = arith.addf %13, %12 : vector<8x128xf32>
    %15 = arith.mulf %9, %14 : vector<8x128xf32>
    %cst_12 = arith.constant 5.000000e-01 : f32
    %16 = vector.broadcast %cst_12 : f32 to vector<8x128xf32>
    %17 = arith.mulf %16, %7 : vector<8x128xf32>
    %18 = math.tanh %15 : vector<8x128xf32>
    %cst_13 = arith.constant 1.000000e+00 : f32
    %19 = vector.broadcast %cst_13 : f32 to vector<8x128xf32>
    %20 = arith.addf %19, %18 : vector<8x128xf32>
    %21 = arith.mulf %17, %20 : vector<8x128xf32>
    %22 = arith.truncf %21 : vector<8x128xf32> to vector<8x128xbf16>
    %cst_14 = arith.constant dense<0.000000e+00> : vector<8x128xf32>
    %23 = tpu.matmul %22, %3, %cst_14 {dimension_numbers = #tpu.dot_dimension_numbers<[1], [0], [0], [1], [0, 0, 1, 1], [], []>} : vector<8x128xbf16>, vector<128x128xbf16>, vector<8x128xf32> -> vector<8x128xf32>
    %24 = vector.broadcast %4 : vector<1x128xf32> to vector<8x128xf32>
    %25 = arith.addf %23, %24 : vector<8x128xf32>
    %c0_15 = arith.constant 0 : index
    %c0_16 = arith.constant 0 : index
    %26 = vector.load %arg6[%c0_15, %c0_16] : memref<8x128xf32, #tpu.memory_space<vmem>>, vector<8x128xf32>
    tpu.vector_store %arg6[%c0_15, %c0_16], %25 {strides = array<i32>} : memref<8x128xf32, #tpu.memory_space<vmem>>, vector<8x128xf32>,
    return
  }
  func.func @transform_0(%arg0: i32) -> (i32, i32) {
    %c0_i32 = arith.constant 0 : i32
    %c0_i32_0 = arith.constant 0 : i32
    return %arg0, %c0_i32 : i32, i32
  }
  func.func @transform_1(%arg0: i32) -> (i32, i32) {
    %c0_i32 = arith.constant 0 : i32
    %c0_i32_0 = arith.constant 0 : i32
    %c0_i32_1 = arith.constant 0 : i32
    return %c0_i32, %c0_i32_0 : i32, i32
  }
  func.func @transform_2(%arg0: i32) -> (i32, i32) {
    %c0_i32 = arith.constant 0 : i32
    %c0_i32_0 = arith.constant 0 : i32
    %c0_i32_1 = arith.constant 0 : i32
    return %c0_i32, %c0_i32_0 : i32, i32
  }
  func.func @transform_3(%arg0: i32) -> (i32, i32) {
    %c0_i32 = arith.constant 0 : i32
    %c0_i32_0 = arith.constant 0 : i32
    %c0_i32_1 = arith.constant 0 : i32
    return %c0_i32, %c0_i32_0 : i32, i32
  }
  func.func @transform_4(%arg0: i32) -> (i32, i32) {
    %c0_i32 = arith.constant 0 : i32
    %c0_i32_0 = arith.constant 0 : i32
    %c0_i32_1 = arith.constant 0 : i32
    return %c0_i32, %c0_i32_0 : i32, i32
  }
  func.func @transform_5(%arg0: i32) -> (i32, i32) {
    %c0_i32 = arith.constant 0 : i32
    %c0_i32_0 = arith.constant 0 : i32
    return %arg0, %c0_i32 : i32, i32
  }
}

module attributes {stable_mosaic.version = 11 : i64} {
  func.func @ffn_kernel(%arg0: i32, %arg1: memref<8x128xbf16, #tpu.memory_space<vmem>>, %arg2: memref<128x128xbf16, #tpu.memory_space<vmem>>, %arg3: memref<1x128xf32, #tpu.memory_space<vmem>>, %arg4: memref<128x128xbf16, #tpu.memory_space<vmem>>, %arg5: memref<1x128xf32, #tpu.memory_space<vmem>>, %arg6: memref<8x128xf32, #tpu.memory_space<vmem>>) attributes {dimension_semantics = [#tpu.dimension_semantics<parallel>], iteration_bounds = array<i64: 2>, scalar_prefetch = 0 : i64, scratch_operands = 0 : i64, tpu.core_type = #tpu.core_type<tc>, window_params = [{transform_indices = @transform_0, window_bounds = array<i64: 8, 128>}, {pipeline_mode = #tpu.pipeline_mode<synchronous>, transform_indices = @transform_1, window_bounds = array<i64: 128, 128>}, {pipeline_mode = #tpu.pipeline_mode<synchronous>, transform_indices = @transform_2, window_bounds = array<i64: 1, 128>}, {pipeline_mode = #tpu.pipeline_mode<synchronous>, transform_indices = @transform_3, window_bounds = array<i64: 128, 128>}, {pipeline_mode = #tpu.pipeline_mode<synchronous>, transform_indices = @transform_4, window_bounds = array<i64: 1, 128>}, {transform_indices = @transform_5, window_bounds = array<i64: 8, 128>}]} {
    %c0 = arith.constant 0 : index
    %c0_0 = arith.constant 0 : index
    %0 = vector.load %arg1[%c0, %c0_0] : memref<8x128xbf16, #tpu.memory_space<vmem>>, vector<8x128xbf16>
    %c0_1 = arith.constant 0 : index
    %c0_2 = arith.constant 0 : index
    %1 = vector.load %arg2[%c0_1, %c0_2] : memref<128x128xbf16, #tpu.memory_space<vmem>>, vector<128x128xbf16>
    %c0_3 = arith.constant 0 : index
    %c0_4 = arith.constant 0 : index
    %2 = vector.load %arg3[%c0_3, %c0_4] : memref<1x128xf32, #tpu.memory_space<vmem>>, vector<1x128xf32>
    %c0_5 = arith.constant 0 : index
    %c0_6 = arith.constant 0 : index
    %3 = vector.load %arg4[%c0_5, %c0_6] : memref<128x128xbf16, #tpu.memory_space<vmem>>, vector<128x128xbf16>
    %c0_7 = arith.constant 0 : index
    %c0_8 = arith.constant 0 : index
    %4 = vector.load %arg5[%c0_7, %c0_8] : memref<1x128xf32, #tpu.memory_space<vmem>>, vector<1x128xf32>
    %cst = arith.constant dense<0.000000e+00> : vector<8x128xf32>
    %5 = tpu.matmul %0, %1, %cst {dimension_numbers = #tpu.dot_dimension_numbers<[1], [0], [0], [1], [0, 0, 1, 1], [], []>} : vector<8x128xbf16>, vector<128x128xbf16>, vector<8x128xf32> -> vector<8x128xf32>
    %6 = vector.broadcast %2 : vector<1x128xf32> to vector<8x128xf32>
    %7 = arith.addf %5, %6 : vector<8x128xf32>
    %cst_9 = arith.constant 0.797884583 : f32
    %8 = vector.broadcast %cst_9 : f32 to vector<8x128xf32>
    %9 = arith.mulf %8, %7 : vector<8x128xf32>
    %cst_10 = arith.constant 4.471500e-02 : f32
    %10 = vector.broadcast %cst_10 : f32 to vector<8x128xf32>
    %11 = arith.mulf %10, %7 : vector<8x128xf32>
    %12 = arith.mulf %11, %7 : vector<8x128xf32>
    %cst_11 = arith.constant 1.000000e+00 : f32
    %13 = vector.broadcast %cst_11 : f32 to vector<8x128xf32>
    %14 = arith.addf %13, %12 : vector<8x128xf32>
    %15 = arith.mulf %9, %14 : vector<8x128xf32>
    %cst_12 = arith.constant 5.000000e-01 : f32
    %16 = vector.broadcast %cst_12 : f32 to vector<8x128xf32>
    %17 = arith.mulf %16, %7 : vector<8x128xf32>
    %18 = math.tanh %15 : vector<8x128xf32>
    %cst_13 = arith.constant 1.000000e+00 : f32
    %19 = vector.broadcast %cst_13 : f32 to vector<8x128xf32>
    %20 = arith.addf %19, %18 : vector<8x128xf32>
    %21 = arith.mulf %17, %20 : vector<8x128xf32>
    %22 = arith.truncf %21 : vector<8x128xf32> to vector<8x128xbf16>
    %cst_14 = arith.constant dense<0.000000e+00> : vector<8x128xf32>
    %23 = tpu.matmul %22, %3, %cst_14 {dimension_numbers = #tpu.dot_dimension_numbers<[1], [0], [0], [1], [0, 0, 1, 1], [], []>} : vector<8x128xbf16>, vector<128x128xbf16>, vector<8x128xf32> -> vector<8x128xf32>
    %24 = vector.broadcast %4 : vector<1x128xf32> to vector<8x128xf32>
    %25 = arith.addf %23, %24 : vector<8x128xf32>
    %c0_15 = arith.constant 0 : index
    %c0_16 = arith.constant 0 : index
    %26 = vector.load %arg6[%c0_15, %c0_16] : memref<8x128xf32, #tpu.memory_space<vmem>>, vector<8x128xf32>
    tpu.vector_store %arg6[%c0_15, %c0_16], %25 {strides = array<i32>} : memref<8x128xf32, #tpu.memory_space<vmem>>, vector<8x128xf32>,
    return
  }
  func.func @transform_0(%arg0: i32) -> (i32, i32) {
    %c0_i32 = arith.constant 0 : i32
    %c0_i32_0 = arith.constant 0 : i32
    return %arg0, %c0_i32 : i32, i32
  }
  func.func @transform_1(%arg0: i32) -> (i32, i32) {
    %c0_i32 = arith.constant 0 : i32
    %c0_i32_0 = arith.constant 0 : i32
    %c0_i32_1 = arith.constant 0 : i32
    return %c0_i32, %c0_i32_0 : i32, i32
  }
  func.func @transform_2(%arg0: i32) -> (i32, i32) {
    %c0_i32 = arith.constant 0 : i32
    %c0_i32_0 = arith.constant 0 : i32
    %c0_i32_1 = arith.constant 0 : i32
    return %c0_i32, %c0_i32_0 : i32, i32
  }
  func.func @transform_3(%arg0: i32) -> (i32, i32) {
    %c0_i32 = arith.constant 0 : i32
    %c0_i32_0 = arith.constant 0 : i32
    %c0_i32_1 = arith.constant 0 : i32
    return %c0_i32, %c0_i32_0 : i32, i32
  }
  func.func @transform_4(%arg0: i32) -> (i32, i32) {
    %c0_i32 = arith.constant 0 : i32
    %c0_i32_0 = arith.constant 0 : i32
    %c0_i32_1 = arith.constant 0 : i32
    return %c0_i32, %c0_i32_0 : i32, i32
  }
  func.func @transform_5(%arg0: i32) -> (i32, i32) {
    %c0_i32 = arith.constant 0 : i32
    %c0_i32_0 = arith.constant 0 : i32
    return %arg0, %c0_i32 : i32, i32
  }
}

</mosaic_0001>

<llo_original>
// kernel: tpu_custom_call.1
$region0: #{tpu_custom_call.1}
  #allocation0 [shape = 'u32[]', space=smem, size = 0x4, offset = 0x4, fixed_abs, tag = 'smem constant byte address 0x4 - core index']
  #allocation1 [shape = 'u32[144,128]{1,0:T(1,128)}', space=vmem, size = 0x12000, scoped, tag = 'internal scratch']
  %s0 = inlined_call_operand.hbm [shape: bf16[16,128], index: 0, kind: input, shape index: {}]
  %s1 = inlined_call_operand.hbm [shape: bf16[128,128], index: 1, kind: input, shape index: {}]
  %s2 = inlined_call_operand.vmem [shape: f32[1,128], index: 2, kind: input, shape index: {}]
  %s3 = inlined_call_operand.hbm [shape: bf16[128,128], index: 3, kind: input, shape index: {}]
  %s4 = inlined_call_operand.vmem [shape: f32[1,128], index: 4, kind: input, shape index: {}]
  %s5 = inlined_call_operand.hbm [shape: f32[16,128], index: 5, kind: output, shape index: {}]
  %s6 = sld [smem:[#allocation0]]
  $region65: #{tpu_custom_call.1} parent=0
    _
  %s8 = ssub.s32 1, %s6
  %s9 = scalar_select 0, %s8, %s6
  $region1: #{tpu_custom_call.1} parent=0
    #allocation2 [shape = 'u8[4096]{0}', space=vmem, size = 0x1000, scoped, tag = 'input window, operand 0']
    #allocation3 [shape = 's32[2]{0}', space=sflag, size = 0x8, scoped, tag = 'scoped memory for tpu_custom_call.1']
    #allocation4 [shape = 's32[2]{0}', space=sflag, size = 0x8, scoped, tag = 'scoped memory for tpu_custom_call.1']
    #allocation5 [shape = 'u8[32768]{0}', space=vmem, size = 0x8000, scoped, tag = 'input window, operand 1, single buffered']
    #allocation6 [shape = 's32[1]{0}', space=sflag, size = 0x4, scoped, tag = 'scoped memory for tpu_custom_call.1']
    #allocation7 [shape = 'u8[32768]{0}', space=vmem, size = 0x8000, scoped, tag = 'input window, operand 3, single buffered']
    #allocation8 [shape = 'u8[8192]{0}', space=vmem, size = 0x2000, scoped, tag = 'output window, operand 0']
    %10 = vsyncpa [#allocation3], 0
    %s11 = scalar_lea.sflag [#allocation3], 1
    %12 = vsyncpa %s11, 0
    %13 = vsyncpa [#allocation6], 0
    %14 = vsyncpa [#allocation4], 0
    %s15 = scalar_lea.sflag [#allocation4], 1
    %16 = vsyncpa %s15, 0
    loop: start=0, step=1, limit=4
    $region2: #{tpu_custom_call.1} parent=1 // loop_pre_header
      _
    $region3: #{tpu_custom_call.1} parent=1 // loop_header
      %s18 = sphi 0, %s22
      %p19 = scmp.ge.s32.totalorder %s18, 4
      %s28 = sphi 0, %s30
      %s31 = sphi 0, %s28
      %s32 = sphi 0, %s31
      %s48 = sphi 0, %s32
      %s52 = sphi 0, %s52
      %s54 = sphi 0, %s52
      %s55 = sphi 0, %s54
      %s69 = sphi 0, %s55
      %s73 = sphi 0, %s73
      %s75 = sphi 0, %s73
      %s76 = sphi 0, %s75
      %s90 = sphi 0, %s76
      %s94 = sphi 0, %s94
      %s96 = sphi 0, %s94
      %s97 = sphi 0, %s96
      %s111 = sphi 0, %s97
      %s115 = sphi 0, %s115
      %s117 = sphi 0, %s115
      %s118 = sphi 0, %s117
      %s132 = sphi 0, %s118
      %s138 = sphi 0, %s140
      %s141 = sphi 0, %s138
      %s142 = sphi 0, %s141
      %s158 = sphi 0, %s142
    $region4: #{tpu_custom_call.1} parent=1 // loop_header_branch
      %21 = sbr.rel (%p19) target = $region8
    $region5: #{tpu_custom_call.1} parent=1 // loop_body
      %s23 = ssub.s32 %s18, 1
      %s24 = ssub.s32 %s18, 2
      %s25 = sadd.s32 %s18, 1
      %s26 = ssub.s32 %s18, %s25
      %p27 = scmp.eq.s32.totalorder %s26, 0
      %s29 = sadd.s32 %s28, 1
      %s30 = scalar_select %p27, %s28, %s29
      %p33 = pneg %p27
      %p34 = scmp.eq.s32.totalorder %s18, 1
      %p35 = por %p33, %p34
      %p36 = scmp.ne.s32.totalorder %s28, %s31
      %p37 = scmp.eq.s32.totalorder %s18, 0
      %p38 = por %p36, %p37
      %p39 = scmp.ne.s32.totalorder %s28, %s31
      %p40 = scmp.eq.s32.totalorder %s23, 1
      %p41 = por %p39, %p40
      %p42 = scmp.ne.s32.totalorder %s31, %s32
      %p43 = scmp.eq.s32.totalorder %s23, 0
      %p44 = por %p42, %p43
      %p45 = scmp.ne.s32.totalorder %s31, %s32
      %p46 = scmp.eq.s32.totalorder %s24, 1
      %p47 = por %p45, %p46
      %p49 = scmp.ne.s32.totalorder %s32, %s48
      %p50 = scmp.eq.s32.totalorder %s24, 0
      %p51 = por %p49, %p50
      %s53 = sadd.s32 %s52, 1
      %p56 = scmp.eq.s32.totalorder %s18, 1
      %p57 = scmp.ne.s32.totalorder %s52, %s54
      %p58 = scmp.eq.s32.totalorder %s18, 0
      %p59 = por %p57, %p58
      %p60 = scmp.ne.s32.totalorder %s52, %s54
      %p61 = scmp.eq.s32.totalorder %s23, 1
      %p62 = por %p60, %p61
      %p63 = scmp.ne.s32.totalorder %s54, %s55
      %p64 = scmp.eq.s32.totalorder %s23, 0
      %p65 = por %p63, %p64
      %p66 = scmp.ne.s32.totalorder %s54, %s55
      %p67 = scmp.eq.s32.totalorder %s24, 1
      %p68 = por %p66, %p67
      %p70 = scmp.ne.s32.totalorder %s55, %s69
      %p71 = scmp.eq.s32.totalorder %s24, 0
      %p72 = por %p70, %p71
      %s74 = sadd.s32 %s73, 1
      %p77 = scmp.eq.s32.totalorder %s18, 1
      %p78 = scmp.ne.s32.totalorder %s73, %s75
      %p79 = scmp.eq.s32.totalorder %s18, 0
      %p80 = por %p78, %p79
      %p81 = scmp.ne.s32.totalorder %s73, %s75
      %p82 = scmp.eq.s32.totalorder %s23, 1
      %p83 = por %p81, %p82
      %p84 = scmp.ne.s32.totalorder %s75, %s76
      %p85 = scmp.eq.s32.totalorder %s23, 0
      %p86 = por %p84, %p85
      %p87 = scmp.ne.s32.totalorder %s75, %s76
      %p88 = scmp.eq.s32.totalorder %s24, 1
      %p89 = por %p87, %p88
      %p91 = scmp.ne.s32.totalorder %s76, %s90
      %p92 = scmp.eq.s32.totalorder %s24, 0
      %p93 = por %p91, %p92
      %s95 = sadd.s32 %s94, 1
      %p98 = scmp.eq.s32.totalorder %s18, 1
      %p99 = scmp.ne.s32.totalorder %s94, %s96
      %p100 = scmp.eq.s32.totalorder %s18, 0
      %p101 = por %p99, %p100
      %p102 = scmp.ne.s32.totalorder %s94, %s96
      %p103 = scmp.eq.s32.totalorder %s23, 1
      %p104 = por %p102, %p103
      %p105 = scmp.ne.s32.totalorder %s96, %s97
      %p106 = scmp.eq.s32.totalorder %s23, 0
      %p107 = por %p105, %p106
      %p108 = scmp.ne.s32.totalorder %s96, %s97
      %p109 = scmp.eq.s32.totalorder %s24, 1
      %p110 = por %p108, %p109
      %p112 = scmp.ne.s32.totalorder %s97, %s111
      %p113 = scmp.eq.s32.totalorder %s24, 0
      %p114 = por %p112, %p113
      %s116 = sadd.s32 %s115, 1
      %p119 = scmp.eq.s32.totalorder %s18, 1
      %p120 = scmp.ne.s32.totalorder %s115, %s117
      %p121 = scmp.eq.s32.totalorder %s18, 0
      %p122 = por %p120, %p121
      %p123 = scmp.ne.s32.totalorder %s115, %s117
      %p124 = scmp.eq.s32.totalorder %s23, 1
      %p125 = por %p123, %p124
      %p126 = scmp.ne.s32.totalorder %s117, %s118
      %p127 = scmp.eq.s32.totalorder %s23, 0
      %p128 = por %p126, %p127
      %p129 = scmp.ne.s32.totalorder %s117, %s118
      %p130 = scmp.eq.s32.totalorder %s24, 1
      %p131 = por %p129, %p130
      %p133 = scmp.ne.s32.totalorder %s118, %s132
      %p134 = scmp.eq.s32.totalorder %s24, 0
      %p135 = por %p133, %p134
      %s136 = ssub.s32 %s18, %s25
      %p137 = scmp.eq.s32.totalorder %s136, 0
      %s139 = sadd.s32 %s138, 1
      %s140 = scalar_select %p137, %s138, %s139
      %p143 = pneg %p137
      %p144 = scmp.eq.s32.totalorder %s18, 1
      %p145 = por %p143, %p144
      %p146 = scmp.ne.s32.totalorder %s138, %s141
      %p147 = scmp.eq.s32.totalorder %s18, 0
      %p148 = por %p146, %p147
      %p149 = scmp.ne.s32.totalorder %s138, %s141
      %p150 = scmp.eq.s32.totalorder %s23, 1
      %p151 = por %p149, %p150
      %p152 = scmp.ne.s32.totalorder %s141, %s142
      %p153 = scmp.eq.s32.totalorder %s23, 0
      %p154 = por %p152, %p153
      %p155 = scmp.ne.s32.totalorder %s141, %s142
      %p156 = scmp.eq.s32.totalorder %s24, 1
      %p157 = por %p155, %p156
      %p159 = scmp.ne.s32.totalorder %s142, %s158
      %p160 = scmp.eq.s32.totalorder %s24, 0
      %p161 = por %p159, %p160
      %p162 = scmp.le.s32.totalorder 1, %s18
      %p163 = scmp.lt.s32.totalorder %s18, 3
      %p164 = pnand %p162, %p163
      %p165 = pneg %p164
      // Predicated region
      $region9: #{tpu_custom_call.1} parent=5 // pred_check
        _
      $region10: #{tpu_custom_call.1} parent=5 // pred_check_branch
        %167 = sbr.rel (%p164) target = $region12
      $region11: #{tpu_custom_call.1} parent=5 // pred_region
        %s168 = ssub.s32 %s18, 1
        // Predicated region
        $region13: #{tpu_custom_call.1} parent=11 // pred_check
          %p169 = pneg %p65
        $region14: #{tpu_custom_call.1} parent=11 // pred_check_branch
          %171 = sbr.rel (%p169) target = $region16
        $region15: #{tpu_custom_call.1} parent=11 // pred_region
          %s173 = ssub.s32 1024, 1024
          %174 = vsyncadd [#allocation6], %s173
          %s175 = sshll.u32 [#allocation5], 4
          %s176 = int_to_ptr.vmem [resolvable:$true] %s175
          %181 = dma.hbm_to_vmem [thread:$0]  %s1, 1024, %s176, [#allocation6], 64, 64, 4
        $region16: #{tpu_custom_call.1} parent=11 // pred_fallthru
          _
        // Predicated region
        $region17: #{tpu_custom_call.1} parent=11 // pred_check
          %p182 = pneg %p86
        $region18: #{tpu_custom_call.1} parent=11 // pred_check_branch
          %184 = sbr.rel (%p182) target = $region20
        $region19: #{tpu_custom_call.1} parent=11 // pred_region
          _
        $region20: #{tpu_custom_call.1} parent=11 // pred_fallthru
          _
        // Predicated region
        $region21: #{tpu_custom_call.1} parent=11 // pred_check
          %p185 = pneg %p107
        $region22: #{tpu_custom_call.1} parent=11 // pred_check_branch
          %187 = sbr.rel (%p185) target = $region24
        $region23: #{tpu_custom_call.1} parent=11 // pred_region
          %s189 = ssub.s32 1024, 1024
          %190 = vsyncadd [#allocation6], %s189
          %s191 = sshll.u32 [#allocation7], 4
          %s192 = int_to_ptr.vmem [resolvable:$true] %s191
          %197 = dma.hbm_to_vmem [thread:$0]  %s3, 1024, %s192, [#allocation6], 64, 64, 4
        $region24: #{tpu_custom_call.1} parent=11 // pred_fallthru
          _
        // Predicated region
        $region25: #{tpu_custom_call.1} parent=11 // pred_check
          %p198 = pneg %p128
        $region26: #{tpu_custom_call.1} parent=11 // pred_check_branch
          %200 = sbr.rel (%p198) target = $region28
        $region27: #{tpu_custom_call.1} parent=11 // pred_region
          _
        $region28: #{tpu_custom_call.1} parent=11 // pred_fallthru
          _
      $region12: #{tpu_custom_call.1} parent=5 // pred_fallthru
        _
      %p201 = scmp.lt.s32.totalorder %s18, 2
      // Predicated region
      $region29: #{tpu_custom_call.1} parent=5 // pred_check
        %p202 = pneg %p201
      $region30: #{tpu_custom_call.1} parent=5 // pred_check_branch
        %204 = sbr.rel (%p202) target = $region32
      $region31: #{tpu_custom_call.1} parent=5 // pred_region
        // Predicated region
        $region33: #{tpu_custom_call.1} parent=31 // pred_check
          %p205 = pneg %p38
        $region34: #{tpu_custom_call.1} parent=31 // pred_check_branch
          %207 = sbr.rel (%p205) target = $region36
        $region35: #{tpu_custom_call.1} parent=31 // pred_region
          %s208 = sand.u32 %s28, 1
          %s209 = scalar_lea.sflag [#allocation3], %s208
          %s210 = sand.u32 %s28, 1
          %s211 = smul.addr %s210, 4
          %s212 = scalar_lea.vmem [#allocation2], %s211
          %s214 = ssub.s32 64, 64
          %215 = vsyncadd %s209, %s214
          %s216 = smul.addr %s18, 64
          %s217 = scalar_lea.hbm %s0, %s216
          %s219 = sshll.u32 %s212, 4
          %s220 = int_to_ptr.vmem [resolvable:$true] %s219
          %222 = dma.hbm_to_vmem [thread:$0]  %s217, 64, %s220, %s209
        $region36: #{tpu_custom_call.1} parent=31 // pred_fallthru
          _
      $region32: #{tpu_custom_call.1} parent=5 // pred_fallthru
        _
      %p223 = scmp.le.s32.totalorder 1, %s18
      %p224 = scmp.lt.s32.totalorder %s18, 3
      %p225 = pnand %p223, %p224
      %p226 = pneg %p225
      // Predicated region
      $region37: #{tpu_custom_call.1} parent=5 // pred_check
        _
      $region38: #{tpu_custom_call.1} parent=5 // pred_check_branch
        %228 = sbr.rel (%p225) target = $region40
      $region39: #{tpu_custom_call.1} parent=5 // pred_region
        %s229 = ssub.s32 %s18, 1
        %s230 = sand.u32 %s31, 1
        %s231 = scalar_lea.sflag [#allocation3], %s230
        %s232 = sand.u32 %s31, 1
        %s233 = smul.addr %s232, 4
        %s234 = scalar_lea.vmem [#allocation2], %s233
        // Predicated region
        $region41: #{tpu_custom_call.1} parent=39 // pred_check
          %p235 = pneg %p44
        $region42: #{tpu_custom_call.1} parent=39 // pred_check_branch
          %237 = sbr.rel (%p235) target = $region44
        $region43: #{tpu_custom_call.1} parent=39 // pred_region
          %238 = dma.done %s231, 64
        $region44: #{tpu_custom_call.1} parent=39 // pred_fallthru
          _
        // Predicated region
        $region45: #{tpu_custom_call.1} parent=39 // pred_check
          %p239 = pneg %p65
        $region46: #{tpu_custom_call.1} parent=39 // pred_check_branch
          %241 = sbr.rel (%p239) target = $region48
        $region47: #{tpu_custom_call.1} parent=39 // pred_region
          %242 = dma.done [#allocation6], 1024
        $region48: #{tpu_custom_call.1} parent=39 // pred_fallthru
          _
        // Predicated region
        $region49: #{tpu_custom_call.1} parent=39 // pred_check
          %p243 = pneg %p107
        $region50: #{tpu_custom_call.1} parent=39 // pred_check_branch
          %245 = sbr.rel (%p243) target = $region52
        $region51: #{tpu_custom_call.1} parent=39 // pred_region
          %246 = dma.done [#allocation6], 1024
        $region52: #{tpu_custom_call.1} parent=39 // pred_fallthru
          _
        %s247 = sand.u32 %s31, 1
        %s248 = scalar_lea.sflag [#allocation3], %s247
        %s249 = sand.u32 %s31, 1
        %s250 = smul.addr %s249, 4
        %s251 = scalar_lea.vmem [#allocation2], %s250
        %p252 = pneg %p44
        %p253 = pneg %p41
        %p254 = pneg %p65
        %p255 = pneg %p62
        %p256 = pneg %p86
        %p257 = pneg %p83
        %p258 = pneg %p107
        %p259 = pneg %p104
        %p260 = pneg %p128
        %p261 = pneg %p125
        %p262 = pneg %p154
        %p263 = pneg %p151
        %s264 = sand.u32 %s141, 1
        %s265 = scalar_lea.sflag [#allocation4], %s264
        %s266 = sand.u32 %s141, 1
        %s267 = smul.addr %s266, 8
        %s268 = scalar_lea.vmem [#allocation8], %s267
        %v270 = vld [vmem:[%s234] sm:$0xf]
        %v271 = vld [vmem:[#allocation5] sm:$0xf]
        %v272 = vld [vmem:[#allocation5 + $0x4] sm:$0xf]
        %v273 = vld [vmem:[#allocation5 + $0x8] sm:$0xf]
        %v274 = vld [vmem:[#allocation5 + $0xc] sm:$0xf]
        %v275 = vld [vmem:[#allocation5 + $0x10] sm:$0xf]
        %v276 = vld [vmem:[#allocation5 + $0x14] sm:$0xf]
        %v277 = vld [vmem:[#allocation5 + $0x18] sm:$0xf]
        %v278 = vld [vmem:[#allocation5 + $0x1c] sm:$0xf]
        %v279 = vld [vmem:[#allocation5 + $0x20] sm:$0xf]
        %v280 = vld [vmem:[#allocation5 + $0x24] sm:$0xf]
        %v281 = vld [vmem:[#allocation5 + $0x28] sm:$0xf]
        %v282 = vld [vmem:[#allocation5 + $0x2c] sm:$0xf]
        %v283 = vld [vmem:[#allocation5 + $0x30] sm:$0xf]
        %v284 = vld [vmem:[#allocation5 + $0x34] sm:$0xf]
        %v285 = vld [vmem:[#allocation5 + $0x38] sm:$0xf]
        %v286 = vld [vmem:[#allocation5 + $0x3c] sm:$0xf]
        %v287 = vld [vmem:[%s2] sm:$0x1]
        %v288 = vld [vmem:[#allocation7] sm:$0xf]
        %v289 = vld [vmem:[#allocation7 + $0x4] sm:$0xf]
        %v290 = vld [vmem:[#allocation7 + $0x8] sm:$0xf]
        %v291 = vld [vmem:[#allocation7 + $0xc] sm:$0xf]
        %v292 = vld [vmem:[#allocation7 + $0x10] sm:$0xf]
        %v293 = vld [vmem:[#allocation7 + $0x14] sm:$0xf]
        %v294 = vld [vmem:[#allocation7 + $0x18] sm:$0xf]
        %v295 = vld [vmem:[#allocation7 + $0x1c] sm:$0xf]
        %v296 = vld [vmem:[#allocation7 + $0x20] sm:$0xf]
        %v297 = vld [vmem:[#allocation7 + $0x24] sm:$0xf]
        %v298 = vld [vmem:[#allocation7 + $0x28] sm:$0xf]
        %v299 = vld [vmem:[#allocation7 + $0x2c] sm:$0xf]
        %v300 = vld [vmem:[#allocation7 + $0x30] sm:$0xf]
        %v301 = vld [vmem:[#allocation7 + $0x34] sm:$0xf]
        %v302 = vld [vmem:[#allocation7 + $0x38] sm:$0xf]
        %v303 = vld [vmem:[#allocation7 + $0x3c] sm:$0xf]
        %v304 = vld [vmem:[%s4] sm:$0x1]
        %v306 = vlaneseq
        %v307 = vshrl.u32 %v306, 7
        %v308 = vsub.s32 0, %v307
        %v309 = vrot.slane %v287, %v308
        %v327 = vunpack.c.l.b16 %v271
        %v328 = vunpack.c.l.b16 %v272
        %v329 = vunpack.c.l.b16 %v273
        %v330 = vunpack.c.l.b16 %v274
        %v331 = vunpack.c.l.b16 %v275
        %v332 = vunpack.c.l.b16 %v276
        %v333 = vunpack.c.l.b16 %v277
        %v334 = vunpack.c.l.b16 %v278
        %v335 = vunpack.c.l.b16 %v279
        %v336 = vunpack.c.l.b16 %v280
        %v337 = vunpack.c.l.b16 %v281
        %v338 = vunpack.c.l.b16 %v282
        %v339 = vunpack.c.l.b16 %v283
        %v340 = vunpack.c.l.b16 %v284
        %v341 = vunpack.c.l.b16 %v285
        %v342 = vunpack.c.l.b16 %v286
        %v343 = vpack.c.b16 %v328, %v327
        %v344 = vpack.c.b16 %v330, %v329
        %v345 = vpack.c.b16 %v332, %v331
        %v346 = vpack.c.b16 %v334, %v333
        %v347 = vpack.c.b16 %v336, %v335
        %v348 = vpack.c.b16 %v338, %v337
        %v349 = vpack.c.b16 %v340, %v339
        %v350 = vpack.c.b16 %v342, %v341
        %359 = vmatprep.subr.bf16.mxu0 0
        %360 = vmatpush1.bf16.msra.mxu0 %v343
        %361 = vmatprep.subr.bf16.mxu0 0
        %362 = vmatpush1.bf16.msra.mxu0 %v344
        %363 = vmatprep.subr.bf16.mxu0 0
        %364 = vmatpush1.bf16.msra.mxu0 %v345
        %365 = vmatprep.subr.bf16.mxu0 0
        %366 = vmatpush1.bf16.msra.mxu0 %v346
        %367 = vmatprep.subr.bf16.mxu0 0
        %368 = vmatpush1.bf16.msra.mxu0 %v347
        %369 = vmatprep.subr.bf16.mxu0 0
        %370 = vmatpush1.bf16.msra.mxu0 %v348
        %371 = vmatprep.subr.bf16.mxu0 0
        %372 = vmatpush1.bf16.msra.mxu0 %v349
        %373 = vmatprep.subr.bf16.mxu0 0
        %374 = vmatpush1.bf16.msra.mxu0 %v350
        %375 = vmatprep.subr.bf16.mxu0 0
        %376 = vmatpush1.bf16.msra.mxu0 0
        %377 = vmatprep.subr.bf16.mxu0 0
        %378 = vmatpush1.bf16.msra.mxu0 0
        %379 = vmatprep.subr.bf16.mxu0 0
        %380 = vmatpush1.bf16.msra.mxu0 0
        %381 = vmatprep.subr.bf16.mxu0 0
        %382 = vmatpush1.bf16.msra.mxu0 0
        %383 = vmatprep.subr.bf16.mxu0 0
        %384 = vmatpush1.bf16.msra.mxu0 0
        %385 = vmatprep.subr.bf16.mxu0 0
        %386 = vmatpush1.bf16.msra.mxu0 0
        %387 = vmatprep.subr.bf16.mxu0 0
        %388 = vmatpush1.bf16.msra.mxu0 0
        %389 = vmatprep.subr.bf16.mxu0 0
        %390 = vmatpush1.bf16.msra.mxu0 0
        %391 = vmatprep.mubr.bf16.mxu0 0
        %392 = vmatmul.mubr.bf16.gmra.mrb[0].mxu0 %v270
        %v393 = vpop.f32.mrb[0].mxu0
        %v394 = vadd.f32 %v309, %v393
        %v395 = vpop.f32.mrb[0].mxu0
        %v396 = vpop.f32.mrb[0].mxu0
        %v397 = vpop.f32.mrb[0].mxu0
        %398 = vdwg.mxu0
        %v399 = vmul.f32 %v394, 0.7978846
        %v400 = vmul.f32 %v394, 0.044715
        %v401 = vmul.f32 %v400, %v394
        %v402 = vadd.f32 %v401, 1.0
        %v403 = vmul.f32 %v399, %v402
        %v404 = vmul.f32 %v394, 0.5
        %v405 = vtanh.pop %v403
        %v406 = vadd.f32 %v405, 1.0
        %v407 = vmul.f32 %v404, %v406
        %v408 = vpack.c.bf16 %v407, %v407
        %v410 = vlaneseq
        %v411 = vshrl.u32 %v410, 7
        %v412 = vsub.s32 0, %v411
        %v413 = vrot.slane %v304, %v412
        %v431 = vunpack.c.l.b16 %v288
        %v432 = vunpack.c.l.b16 %v289
        %v433 = vunpack.c.l.b16 %v290
        %v434 = vunpack.c.l.b16 %v291
        %v435 = vunpack.c.l.b16 %v292
        %v436 = vunpack.c.l.b16 %v293
        %v437 = vunpack.c.l.b16 %v294
        %v438 = vunpack.c.l.b16 %v295
        %v439 = vunpack.c.l.b16 %v296
        %v440 = vunpack.c.l.b16 %v297
        %v441 = vunpack.c.l.b16 %v298
        %v442 = vunpack.c.l.b16 %v299
        %v443 = vunpack.c.l.b16 %v300
        %v444 = vunpack.c.l.b16 %v301
        %v445 = vunpack.c.l.b16 %v302
        %v446 = vunpack.c.l.b16 %v303
        %v447 = vpack.c.b16 %v432, %v431
        %v448 = vpack.c.b16 %v434, %v433
        %v449 = vpack.c.b16 %v436, %v435
        %v450 = vpack.c.b16 %v438, %v437
        %v451 = vpack.c.b16 %v440, %v439
        %v452 = vpack.c.b16 %v442, %v441
        %v453 = vpack.c.b16 %v444, %v443
        %v454 = vpack.c.b16 %v446, %v445
        %463 = vmatprep.subr.bf16.mxu0 0
        %464 = vmatpush1.bf16.msra.mxu0 %v447
        %465 = vmatprep.subr.bf16.mxu0 0
        %466 = vmatpush1.bf16.msra.mxu0 %v448
        %467 = vmatprep.subr.bf16.mxu0 0
        %468 = vmatpush1.bf16.msra.mxu0 %v449
        %469 = vmatprep.subr.bf16.mxu0 0
        %470 = vmatpush1.bf16.msra.mxu0 %v450
        %471 = vmatprep.subr.bf16.mxu0 0
        %472 = vmatpush1.bf16.msra.mxu0 %v451
        %473 = vmatprep.subr.bf16.mxu0 0
        %474 = vmatpush1.bf16.msra.mxu0 %v452
        %475 = vmatprep.subr.bf16.mxu0 0
        %476 = vmatpush1.bf16.msra.mxu0 %v453
        %477 = vmatprep.subr.bf16.mxu0 0
        %478 = vmatpush1.bf16.msra.mxu0 %v454
        %479 = vmatprep.subr.bf16.mxu0 0
        %480 = vmatpush1.bf16.msra.mxu0 0
        %481 = vmatprep.subr.bf16.mxu0 0
        %482 = vmatpush1.bf16.msra.mxu0 0
        %483 = vmatprep.subr.bf16.mxu0 0
        %484 = vmatpush1.bf16.msra.mxu0 0
        %485 = vmatprep.subr.bf16.mxu0 0
        %486 = vmatpush1.bf16.msra.mxu0 0
        %487 = vmatprep.subr.bf16.mxu0 0
        %488 = vmatpush1.bf16.msra.mxu0 0
        %489 = vmatprep.subr.bf16.mxu0 0
        %490 = vmatpush1.bf16.msra.mxu0 0
        %491 = vmatprep.subr.bf16.mxu0 0
        %492 = vmatpush1.bf16.msra.mxu0 0
        %493 = vmatprep.subr.bf16.mxu0 0
        %494 = vmatpush1.bf16.msra.mxu0 0
        %495 = vmatprep.mubr.bf16.mxu0 0
        %496 = vmatmul.mubr.bf16.gmra.mrb[0].mxu0 %v408
        %v497 = vpop.f32.mrb[0].mxu0
        %v498 = vadd.f32 %v413, %v497
        %v499 = vpop.f32.mrb[0].mxu0
        %v500 = vpop.f32.mrb[0].mxu0
        %v501 = vpop.f32.mrb[0].mxu0
        %502 = vdwg.mxu0
        %503 = vst [vmem:[%s268] sm:$0xff] %v498
        %s504 = sand.u32 %s141, 1
        %s505 = scalar_lea.sflag [#allocation4], %s504
        %s506 = sand.u32 %s141, 1
        %s507 = smul.addr %s506, 8
        %s508 = scalar_lea.vmem [#allocation8], %s507
        // Predicated region
        $region53: #{tpu_custom_call.1} parent=39 // pred_check
          %p509 = pneg %p151
        $region54: #{tpu_custom_call.1} parent=39 // pred_check_branch
          %511 = sbr.rel (%p509) target = $region56
        $region55: #{tpu_custom_call.1} parent=39 // pred_region
          %s513 = ssub.s32 128, 128
          %514 = vsyncadd %s505, %s513
          %s515 = smul.addr %s23, 128
          %s516 = scalar_lea.hbm %s5, %s515
          %s518 = sshll.u32 %s508, 4
          %s519 = int_to_ptr.vmem [resolvable:$true] %s518
          %521 = dma.vmem_to_hbm [thread:$0]  %s519, 128, %s516, %s505
        $region56: #{tpu_custom_call.1} parent=39 // pred_fallthru
          _
      $region40: #{tpu_custom_call.1} parent=5 // pred_fallthru
        _
      %p522 = scmp.le.s32.totalorder 2, %s18
      // Predicated region
      $region57: #{tpu_custom_call.1} parent=5 // pred_check
        %p523 = pneg %p522
      $region58: #{tpu_custom_call.1} parent=5 // pred_check_branch
        %525 = sbr.rel (%p523) target = $region60
      $region59: #{tpu_custom_call.1} parent=5 // pred_region
        %s526 = ssub.s32 %s18, 2
        // Predicated region
        $region61: #{tpu_custom_call.1} parent=59 // pred_check
          %p527 = pneg %p157
        $region62: #{tpu_custom_call.1} parent=59 // pred_check_branch
          %529 = sbr.rel (%p527) target = $region64
        $region63: #{tpu_custom_call.1} parent=59 // pred_region
          %s530 = sand.u32 %s142, 1
          %s531 = scalar_lea.sflag [#allocation4], %s530
          %s532 = sand.u32 %s142, 1
          %s533 = smul.addr %s532, 8
          %s534 = scalar_lea.vmem [#allocation8], %s533
          %535 = dma.done %s531, 128
        $region64: #{tpu_custom_call.1} parent=59 // pred_fallthru
          _
      $region60: #{tpu_custom_call.1} parent=5 // pred_fallthru
        _
    $region6: #{tpu_custom_call.1} parent=1 // loop_footer
      %s22 = sadd.s32 1, %s18
    $region7: #{tpu_custom_call.1} parent=1 // loop_footer_branch
      %17 = sbr.rel target = $region3
    $region8: #{tpu_custom_call.1} parent=1 // loop_exit
      _
    %536 = vsyncpa [#allocation3], 1
    %s537 = scalar_lea.sflag [#allocation3], 1
    %538 = vsyncpa %s537, 1
    %539 = vsyncpa [#allocation6], 1
    %540 = vsyncpa [#allocation4], 1
    %s541 = scalar_lea.sflag [#allocation4], 1
    %542 = vsyncpa %s541, 1

// kernel: tpu_custom_call.1
$region0: #{tpu_custom_call.1}
  #allocation0 [shape = 'u32[]', space=smem, size = 0x4, offset = 0x4, fixed_abs, tag = 'smem constant byte address 0x4 - core index']
  #allocation1 [shape = 'u32[144,128]{1,0:T(1,128)}', space=vmem, size = 0x12000, scoped, tag = 'internal scratch']
  %s0 = inlined_call_operand.hbm [shape: bf16[16,128], index: 0, kind: input, shape index: {}]
  %s1 = inlined_call_operand.hbm [shape: bf16[128,128], index: 1, kind: input, shape index: {}]
  %s2 = inlined_call_operand.vmem [shape: f32[1,128], index: 2, kind: input, shape index: {}]
  %s3 = inlined_call_operand.hbm [shape: bf16[128,128], index: 3, kind: input, shape index: {}]
  %s4 = inlined_call_operand.vmem [shape: f32[1,128], index: 4, kind: input, shape index: {}]
  %s5 = inlined_call_operand.hbm [shape: f32[16,128], index: 5, kind: output, shape index: {}]
  %s6 = sld [smem:[#allocation0]]
  $region65: #{tpu_custom_call.1} parent=0
    _
  %s8 = ssub.s32 1, %s6
  %s9 = scalar_select 0, %s8, %s6
  $region1: #{tpu_custom_call.1} parent=0
    #allocation2 [shape = 'u8[4096]{0}', space=vmem, size = 0x1000, scoped, tag = 'input window, operand 0']
    #allocation3 [shape = 's32[2]{0}', space=sflag, size = 0x8, scoped, tag = 'scoped memory for tpu_custom_call.1']
    #allocation4 [shape = 's32[2]{0}', space=sflag, size = 0x8, scoped, tag = 'scoped memory for tpu_custom_call.1']
    #allocation5 [shape = 'u8[32768]{0}', space=vmem, size = 0x8000, scoped, tag = 'input window, operand 1, single buffered']
    #allocation6 [shape = 's32[1]{0}', space=sflag, size = 0x4, scoped, tag = 'scoped memory for tpu_custom_call.1']
    #allocation7 [shape = 'u8[32768]{0}', space=vmem, size = 0x8000, scoped, tag = 'input window, operand 3, single buffered']
    #allocation8 [shape = 'u8[8192]{0}', space=vmem, size = 0x2000, scoped, tag = 'output window, operand 0']
    %10 = vsyncpa [#allocation3], 0
    %s11 = scalar_lea.sflag [#allocation3], 1
    %12 = vsyncpa %s11, 0
    %13 = vsyncpa [#allocation6], 0
    %14 = vsyncpa [#allocation4], 0
    %s15 = scalar_lea.sflag [#allocation4], 1
    %16 = vsyncpa %s15, 0
    loop: start=0, step=1, limit=4
    $region2: #{tpu_custom_call.1} parent=1 // loop_pre_header
      _
    $region3: #{tpu_custom_call.1} parent=1 // loop_header
      %s18 = sphi 0, %s22
      %p19 = scmp.ge.s32.totalorder %s18, 4
      %s28 = sphi 0, %s30
      %s31 = sphi 0, %s28
      %s32 = sphi 0, %s31
      %s48 = sphi 0, %s32
      %s52 = sphi 0, %s52
      %s54 = sphi 0, %s52
      %s55 = sphi 0, %s54
      %s69 = sphi 0, %s55
      %s73 = sphi 0, %s73
      %s75 = sphi 0, %s73
      %s76 = sphi 0, %s75
      %s90 = sphi 0, %s76
      %s94 = sphi 0, %s94
      %s96 = sphi 0, %s94
      %s97 = sphi 0, %s96
      %s111 = sphi 0, %s97
      %s115 = sphi 0, %s115
      %s117 = sphi 0, %s115
      %s118 = sphi 0, %s117
      %s132 = sphi 0, %s118
      %s138 = sphi 0, %s140
      %s141 = sphi 0, %s138
      %s142 = sphi 0, %s141
      %s158 = sphi 0, %s142
    $region4: #{tpu_custom_call.1} parent=1 // loop_header_branch
      %21 = sbr.rel (%p19) target = $region8
    $region5: #{tpu_custom_call.1} parent=1 // loop_body
      %s23 = ssub.s32 %s18, 1
      %s24 = ssub.s32 %s18, 2
      %s25 = sadd.s32 %s18, 1
      %s26 = ssub.s32 %s18, %s25
      %p27 = scmp.eq.s32.totalorder %s26, 0
      %s29 = sadd.s32 %s28, 1
      %s30 = scalar_select %p27, %s28, %s29
      %p33 = pneg %p27
      %p34 = scmp.eq.s32.totalorder %s18, 1
      %p35 = por %p33, %p34
      %p36 = scmp.ne.s32.totalorder %s28, %s31
      %p37 = scmp.eq.s32.totalorder %s18, 0
      %p38 = por %p36, %p37
      %p39 = scmp.ne.s32.totalorder %s28, %s31
      %p40 = scmp.eq.s32.totalorder %s23, 1
      %p41 = por %p39, %p40
      %p42 = scmp.ne.s32.totalorder %s31, %s32
      %p43 = scmp.eq.s32.totalorder %s23, 0
      %p44 = por %p42, %p43
      %p45 = scmp.ne.s32.totalorder %s31, %s32
      %p46 = scmp.eq.s32.totalorder %s24, 1
      %p47 = por %p45, %p46
      %p49 = scmp.ne.s32.totalorder %s32, %s48
      %p50 = scmp.eq.s32.totalorder %s24, 0
      %p51 = por %p49, %p50
      %s53 = sadd.s32 %s52, 1
      %p56 = scmp.eq.s32.totalorder %s18, 1
      %p57 = scmp.ne.s32.totalorder %s52, %s54
      %p58 = scmp.eq.s32.totalorder %s18, 0
      %p59 = por %p57, %p58
      %p60 = scmp.ne.s32.totalorder %s52, %s54
      %p61 = scmp.eq.s32.totalorder %s23, 1
      %p62 = por %p60, %p61
      %p63 = scmp.ne.s32.totalorder %s54, %s55
      %p64 = scmp.eq.s32.totalorder %s23, 0
      %p65 = por %p63, %p64
      %p66 = scmp.ne.s32.totalorder %s54, %s55
      %p67 = scmp.eq.s32.totalorder %s24, 1
      %p68 = por %p66, %p67
      %p70 = scmp.ne.s32.totalorder %s55, %s69
      %p71 = scmp.eq.s32.totalorder %s24, 0
      %p72 = por %p70, %p71
      %s74 = sadd.s32 %s73, 1
      %p77 = scmp.eq.s32.totalorder %s18, 1
      %p78 = scmp.ne.s32.totalorder %s73, %s75
      %p79 = scmp.eq.s32.totalorder %s18, 0
      %p80 = por %p78, %p79
      %p81 = scmp.ne.s32.totalorder %s73, %s75
      %p82 = scmp.eq.s32.totalorder %s23, 1
      %p83 = por %p81, %p82
      %p84 = scmp.ne.s32.totalorder %s75, %s76
      %p85 = scmp.eq.s32.totalorder %s23, 0
      %p86 = por %p84, %p85
      %p87 = scmp.ne.s32.totalorder %s75, %s76
      %p88 = scmp.eq.s32.totalorder %s24, 1
      %p89 = por %p87, %p88
      %p91 = scmp.ne.s32.totalorder %s76, %s90
      %p92 = scmp.eq.s32.totalorder %s24, 0
      %p93 = por %p91, %p92
      %s95 = sadd.s32 %s94, 1
      %p98 = scmp.eq.s32.totalorder %s18, 1
      %p99 = scmp.ne.s32.totalorder %s94, %s96
      %p100 = scmp.eq.s32.totalorder %s18, 0
      %p101 = por %p99, %p100
      %p102 = scmp.ne.s32.totalorder %s94, %s96
      %p103 = scmp.eq.s32.totalorder %s23, 1
      %p104 = por %p102, %p103
      %p105 = scmp.ne.s32.totalorder %s96, %s97
      %p106 = scmp.eq.s32.totalorder %s23, 0
      %p107 = por %p105, %p106
      %p108 = scmp.ne.s32.totalorder %s96, %s97
      %p109 = scmp.eq.s32.totalorder %s24, 1
      %p110 = por %p108, %p109
      %p112 = scmp.ne.s32.totalorder %s97, %s111
      %p113 = scmp.eq.s32.totalorder %s24, 0
      %p114 = por %p112, %p113
      %s116 = sadd.s32 %s115, 1
      %p119 = scmp.eq.s32.totalorder %s18, 1
      %p120 = scmp.ne.s32.totalorder %s115, %s117
      %p121 = scmp.eq.s32.totalorder %s18, 0
      %p122 = por %p120, %p121
      %p123 = scmp.ne.s32.totalorder %s115, %s117
      %p124 = scmp.eq.s32.totalorder %s23, 1
      %p125 = por %p123, %p124
      %p126 = scmp.ne.s32.totalorder %s117, %s118
      %p127 = scmp.eq.s32.totalorder %s23, 0
      %p128 = por %p126, %p127
      %p129 = scmp.ne.s32.totalorder %s117, %s118
      %p130 = scmp.eq.s32.totalorder %s24, 1
      %p131 = por %p129, %p130
      %p133 = scmp.ne.s32.totalorder %s118, %s132
      %p134 = scmp.eq.s32.totalorder %s24, 0
      %p135 = por %p133, %p134
      %s136 = ssub.s32 %s18, %s25
      %p137 = scmp.eq.s32.totalorder %s136, 0
      %s139 = sadd.s32 %s138, 1
      %s140 = scalar_select %p137, %s138, %s139
      %p143 = pneg %p137
      %p144 = scmp.eq.s32.totalorder %s18, 1
      %p145 = por %p143, %p144
      %p146 = scmp.ne.s32.totalorder %s138, %s141
      %p147 = scmp.eq.s32.totalorder %s18, 0
      %p148 = por %p146, %p147
      %p149 = scmp.ne.s32.totalorder %s138, %s141
      %p150 = scmp.eq.s32.totalorder %s23, 1
      %p151 = por %p149, %p150
      %p152 = scmp.ne.s32.totalorder %s141, %s142
      %p153 = scmp.eq.s32.totalorder %s23, 0
      %p154 = por %p152, %p153
      %p155 = scmp.ne.s32.totalorder %s141, %s142
      %p156 = scmp.eq.s32.totalorder %s24, 1
      %p157 = por %p155, %p156
      %p159 = scmp.ne.s32.totalorder %s142, %s158
      %p160 = scmp.eq.s32.totalorder %s24, 0
      %p161 = por %p159, %p160
      %p162 = scmp.le.s32.totalorder 1, %s18
      %p163 = scmp.lt.s32.totalorder %s18, 3
      %p164 = pnand %p162, %p163
      %p165 = pneg %p164
      // Predicated region
      $region9: #{tpu_custom_call.1} parent=5 // pred_check
        _
      $region10: #{tpu_custom_call.1} parent=5 // pred_check_branch
        %167 = sbr.rel (%p164) target = $region12
      $region11: #{tpu_custom_call.1} parent=5 // pred_region
        %s168 = ssub.s32 %s18, 1
        // Predicated region
        $region13: #{tpu_custom_call.1} parent=11 // pred_check
          %p169 = pneg %p65
        $region14: #{tpu_custom_call.1} parent=11 // pred_check_branch
          %171 = sbr.rel (%p169) target = $region16
        $region15: #{tpu_custom_call.1} parent=11 // pred_region
          %s173 = ssub.s32 1024, 1024
          %174 = vsyncadd [#allocation6], %s173
          %s175 = sshll.u32 [#allocation5], 4
          %s176 = int_to_ptr.vmem [resolvable:$true] %s175
          %181 = dma.hbm_to_vmem [thread:$0]  %s1, 1024, %s176, [#allocation6], 64, 64, 4
        $region16: #{tpu_custom_call.1} parent=11 // pred_fallthru
          _
        // Predicated region
        $region17: #{tpu_custom_call.1} parent=11 // pred_check
          %p182 = pneg %p86
        $region18: #{tpu_custom_call.1} parent=11 // pred_check_branch
          %184 = sbr.rel (%p182) target = $region20
        $region19: #{tpu_custom_call.1} parent=11 // pred_region
          _
        $region20: #{tpu_custom_call.1} parent=11 // pred_fallthru
          _
        // Predicated region
        $region21: #{tpu_custom_call.1} parent=11 // pred_check
          %p185 = pneg %p107
        $region22: #{tpu_custom_call.1} parent=11 // pred_check_branch
          %187 = sbr.rel (%p185) target = $region24
        $region23: #{tpu_custom_call.1} parent=11 // pred_region
          %s189 = ssub.s32 1024, 1024
          %190 = vsyncadd [#allocation6], %s189
          %s191 = sshll.u32 [#allocation7], 4
          %s192 = int_to_ptr.vmem [resolvable:$true] %s191
          %197 = dma.hbm_to_vmem [thread:$0]  %s3, 1024, %s192, [#allocation6], 64, 64, 4
        $region24: #{tpu_custom_call.1} parent=11 // pred_fallthru
          _
        // Predicated region
        $region25: #{tpu_custom_call.1} parent=11 // pred_check
          %p198 = pneg %p128
        $region26: #{tpu_custom_call.1} parent=11 // pred_check_branch
          %200 = sbr.rel (%p198) target = $region28
        $region27: #{tpu_custom_call.1} parent=11 // pred_region
          _
        $region28: #{tpu_custom_call.1} parent=11 // pred_fallthru
          _
      $region12: #{tpu_custom_call.1} parent=5 // pred_fallthru
        _
      %p201 = scmp.lt.s32.totalorder %s18, 2
      // Predicated region
      $region29: #{tpu_custom_call.1} parent=5 // pred_check
        %p202 = pneg %p201
      $region30: #{tpu_custom_call.1} parent=5 // pred_check_branch
        %204 = sbr.rel (%p202) target = $region32
      $region31: #{tpu_custom_call.1} parent=5 // pred_region
        // Predicated region
        $region33: #{tpu_custom_call.1} parent=31 // pred_check
          %p205 = pneg %p38
        $region34: #{tpu_custom_call.1} parent=31 // pred_check_branch
          %207 = sbr.rel (%p205) target = $region36
        $region35: #{tpu_custom_call.1} parent=31 // pred_region
          %s208 = sand.u32 %s28, 1
          %s209 = scalar_lea.sflag [#allocation3], %s208
          %s210 = sand.u32 %s28, 1
          %s211 = smul.addr %s210, 4
          %s212 = scalar_lea.vmem [#allocation2], %s211
          %s214 = ssub.s32 64, 64
          %215 = vsyncadd %s209, %s214
          %s216 = smul.addr %s18, 64
          %s217 = scalar_lea.hbm %s0, %s216
          %s219 = sshll.u32 %s212, 4
          %s220 = int_to_ptr.vmem [resolvable:$true] %s219
          %222 = dma.hbm_to_vmem [thread:$0]  %s217, 64, %s220, %s209
        $region36: #{tpu_custom_call.1} parent=31 // pred_fallthru
          _
      $region32: #{tpu_custom_call.1} parent=5 // pred_fallthru
        _
      %p223 = scmp.le.s32.totalorder 1, %s18
      %p224 = scmp.lt.s32.totalorder %s18, 3
      %p225 = pnand %p223, %p224
      %p226 = pneg %p225
      // Predicated region
      $region37: #{tpu_custom_call.1} parent=5 // pred_check
        _
      $region38: #{tpu_custom_call.1} parent=5 // pred_check_branch
        %228 = sbr.rel (%p225) target = $region40
      $region39: #{tpu_custom_call.1} parent=5 // pred_region
        %s229 = ssub.s32 %s18, 1
        %s230 = sand.u32 %s31, 1
        %s231 = scalar_lea.sflag [#allocation3], %s230
        %s232 = sand.u32 %s31, 1
        %s233 = smul.addr %s232, 4
        %s234 = scalar_lea.vmem [#allocation2], %s233
        // Predicated region
        $region41: #{tpu_custom_call.1} parent=39 // pred_check
          %p235 = pneg %p44
        $region42: #{tpu_custom_call.1} parent=39 // pred_check_branch
          %237 = sbr.rel (%p235) target = $region44
        $region43: #{tpu_custom_call.1} parent=39 // pred_region
          %238 = dma.done %s231, 64
        $region44: #{tpu_custom_call.1} parent=39 // pred_fallthru
          _
        // Predicated region
        $region45: #{tpu_custom_call.1} parent=39 // pred_check
          %p239 = pneg %p65
        $region46: #{tpu_custom_call.1} parent=39 // pred_check_branch
          %241 = sbr.rel (%p239) target = $region48
        $region47: #{tpu_custom_call.1} parent=39 // pred_region
          %242 = dma.done [#allocation6], 1024
        $region48: #{tpu_custom_call.1} parent=39 // pred_fallthru
          _
        // Predicated region
        $region49: #{tpu_custom_call.1} parent=39 // pred_check
          %p243 = pneg %p107
        $region50: #{tpu_custom_call.1} parent=39 // pred_check_branch
          %245 = sbr.rel (%p243) target = $region52
        $region51: #{tpu_custom_call.1} parent=39 // pred_region
          %246 = dma.done [#allocation6], 1024
        $region52: #{tpu_custom_call.1} parent=39 // pred_fallthru
          _
        %s247 = sand.u32 %s31, 1
        %s248 = scalar_lea.sflag [#allocation3], %s247
        %s249 = sand.u32 %s31, 1
        %s250 = smul.addr %s249, 4
        %s251 = scalar_lea.vmem [#allocation2], %s250
        %p252 = pneg %p44
        %p253 = pneg %p41
        %p254 = pneg %p65
        %p255 = pneg %p62
        %p256 = pneg %p86
        %p257 = pneg %p83
        %p258 = pneg %p107
        %p259 = pneg %p104
        %p260 = pneg %p128
        %p261 = pneg %p125
        %p262 = pneg %p154
        %p263 = pneg %p151
        %s264 = sand.u32 %s141, 1
        %s265 = scalar_lea.sflag [#allocation4], %s264
        %s266 = sand.u32 %s141, 1
        %s267 = smul.addr %s266, 8
        %s268 = scalar_lea.vmem [#allocation8], %s267
        %v270 = vld [vmem:[%s234] sm:$0xf]
        %v271 = vld [vmem:[#allocation5] sm:$0xf]
        %v272 = vld [vmem:[#allocation5 + $0x4] sm:$0xf]
        %v273 = vld [vmem:[#allocation5 + $0x8] sm:$0xf]
        %v274 = vld [vmem:[#allocation5 + $0xc] sm:$0xf]
        %v275 = vld [vmem:[#allocation5 + $0x10] sm:$0xf]
        %v276 = vld [vmem:[#allocation5 + $0x14] sm:$0xf]
        %v277 = vld [vmem:[#allocation5 + $0x18] sm:$0xf]
        %v278 = vld [vmem:[#allocation5 + $0x1c] sm:$0xf]
        %v279 = vld [vmem:[#allocation5 + $0x20] sm:$0xf]
        %v280 = vld [vmem:[#allocation5 + $0x24] sm:$0xf]
        %v281 = vld [vmem:[#allocation5 + $0x28] sm:$0xf]
        %v282 = vld [vmem:[#allocation5 + $0x2c] sm:$0xf]
        %v283 = vld [vmem:[#allocation5 + $0x30] sm:$0xf]
        %v284 = vld [vmem:[#allocation5 + $0x34] sm:$0xf]
        %v285 = vld [vmem:[#allocation5 + $0x38] sm:$0xf]
        %v286 = vld [vmem:[#allocation5 + $0x3c] sm:$0xf]
        %v287 = vld [vmem:[%s2] sm:$0x1]
        %v288 = vld [vmem:[#allocation7] sm:$0xf]
        %v289 = vld [vmem:[#allocation7 + $0x4] sm:$0xf]
        %v290 = vld [vmem:[#allocation7 + $0x8] sm:$0xf]
        %v291 = vld [vmem:[#allocation7 + $0xc] sm:$0xf]
        %v292 = vld [vmem:[#allocation7 + $0x10] sm:$0xf]
        %v293 = vld [vmem:[#allocation7 + $0x14] sm:$0xf]
        %v294 = vld [vmem:[#allocation7 + $0x18] sm:$0xf]
        %v295 = vld [vmem:[#allocation7 + $0x1c] sm:$0xf]
        %v296 = vld [vmem:[#allocation7 + $0x20] sm:$0xf]
        %v297 = vld [vmem:[#allocation7 + $0x24] sm:$0xf]
        %v298 = vld [vmem:[#allocation7 + $0x28] sm:$0xf]
        %v299 = vld [vmem:[#allocation7 + $0x2c] sm:$0xf]
        %v300 = vld [vmem:[#allocation7 + $0x30] sm:$0xf]
        %v301 = vld [vmem:[#allocation7 + $0x34] sm:$0xf]
        %v302 = vld [vmem:[#allocation7 + $0x38] sm:$0xf]
        %v303 = vld [vmem:[#allocation7 + $0x3c] sm:$0xf]
        %v304 = vld [vmem:[%s4] sm:$0x1]
        %v306 = vlaneseq
        %v307 = vshrl.u32 %v306, 7
        %v308 = vsub.s32 0, %v307
        %v309 = vrot.slane %v287, %v308
        %v327 = vunpack.c.l.b16 %v271
        %v328 = vunpack.c.l.b16 %v272
        %v329 = vunpack.c.l.b16 %v273
        %v330 = vunpack.c.l.b16 %v274
        %v331 = vunpack.c.l.b16 %v275
        %v332 = vunpack.c.l.b16 %v276
        %v333 = vunpack.c.l.b16 %v277
        %v334 = vunpack.c.l.b16 %v278
        %v335 = vunpack.c.l.b16 %v279
        %v336 = vunpack.c.l.b16 %v280
        %v337 = vunpack.c.l.b16 %v281
        %v338 = vunpack.c.l.b16 %v282
        %v339 = vunpack.c.l.b16 %v283
        %v340 = vunpack.c.l.b16 %v284
        %v341 = vunpack.c.l.b16 %v285
        %v342 = vunpack.c.l.b16 %v286
        %v343 = vpack.c.b16 %v328, %v327
        %v344 = vpack.c.b16 %v330, %v329
        %v345 = vpack.c.b16 %v332, %v331
        %v346 = vpack.c.b16 %v334, %v333
        %v347 = vpack.c.b16 %v336, %v335
        %v348 = vpack.c.b16 %v338, %v337
        %v349 = vpack.c.b16 %v340, %v339
        %v350 = vpack.c.b16 %v342, %v341
        %359 = vmatprep.subr.bf16.mxu0 0
        %360 = vmatpush1.bf16.msra.mxu0 %v343
        %361 = vmatprep.subr.bf16.mxu0 0
        %362 = vmatpush1.bf16.msra.mxu0 %v344
        %363 = vmatprep.subr.bf16.mxu0 0
        %364 = vmatpush1.bf16.msra.mxu0 %v345
        %365 = vmatprep.subr.bf16.mxu0 0
        %366 = vmatpush1.bf16.msra.mxu0 %v346
        %367 = vmatprep.subr.bf16.mxu0 0
        %368 = vmatpush1.bf16.msra.mxu0 %v347
        %369 = vmatprep.subr.bf16.mxu0 0
        %370 = vmatpush1.bf16.msra.mxu0 %v348
        %371 = vmatprep.subr.bf16.mxu0 0
        %372 = vmatpush1.bf16.msra.mxu0 %v349
        %373 = vmatprep.subr.bf16.mxu0 0
        %374 = vmatpush1.bf16.msra.mxu0 %v350
        %375 = vmatprep.subr.bf16.mxu0 0
        %376 = vmatpush1.bf16.msra.mxu0 0
        %377 = vmatprep.subr.bf16.mxu0 0
        %378 = vmatpush1.bf16.msra.mxu0 0
        %379 = vmatprep.subr.bf16.mxu0 0
        %380 = vmatpush1.bf16.msra.mxu0 0
        %381 = vmatprep.subr.bf16.mxu0 0
        %382 = vmatpush1.bf16.msra.mxu0 0
        %383 = vmatprep.subr.bf16.mxu0 0
        %384 = vmatpush1.bf16.msra.mxu0 0
        %385 = vmatprep.subr.bf16.mxu0 0
        %386 = vmatpush1.bf16.msra.mxu0 0
        %387 = vmatprep.subr.bf16.mxu0 0
        %388 = vmatpush1.bf16.msra.mxu0 0
        %389 = vmatprep.subr.bf16.mxu0 0
        %390 = vmatpush1.bf16.msra.mxu0 0
        %391 = vmatprep.mubr.bf16.mxu0 0
        %392 = vmatmul.mubr.bf16.gmra.mrb[0].mxu0 %v270
        %v393 = vpop.f32.mrb[0].mxu0
        %v394 = vadd.f32 %v309, %v393
        %v395 = vpop.f32.mrb[0].mxu0
        %v396 = vpop.f32.mrb[0].mxu0
        %v397 = vpop.f32.mrb[0].mxu0
        %398 = vdwg.mxu0
        %v399 = vmul.f32 %v394, 0.7978846
        %v400 = vmul.f32 %v394, 0.044715
        %v401 = vmul.f32 %v400, %v394
        %v402 = vadd.f32 %v401, 1.0
        %v403 = vmul.f32 %v399, %v402
        %v404 = vmul.f32 %v394, 0.5
        %v405 = vtanh.pop %v403
        %v406 = vadd.f32 %v405, 1.0
        %v407 = vmul.f32 %v404, %v406
        %v408 = vpack.c.bf16 %v407, %v407
        %v410 = vlaneseq
        %v411 = vshrl.u32 %v410, 7
        %v412 = vsub.s32 0, %v411
        %v413 = vrot.slane %v304, %v412
        %v431 = vunpack.c.l.b16 %v288
        %v432 = vunpack.c.l.b16 %v289
        %v433 = vunpack.c.l.b16 %v290
        %v434 = vunpack.c.l.b16 %v291
        %v435 = vunpack.c.l.b16 %v292
        %v436 = vunpack.c.l.b16 %v293
        %v437 = vunpack.c.l.b16 %v294
        %v438 = vunpack.c.l.b16 %v295
        %v439 = vunpack.c.l.b16 %v296
        %v440 = vunpack.c.l.b16 %v297
        %v441 = vunpack.c.l.b16 %v298
        %v442 = vunpack.c.l.b16 %v299
        %v443 = vunpack.c.l.b16 %v300
        %v444 = vunpack.c.l.b16 %v301
        %v445 = vunpack.c.l.b16 %v302
        %v446 = vunpack.c.l.b16 %v303
        %v447 = vpack.c.b16 %v432, %v431
        %v448 = vpack.c.b16 %v434, %v433
        %v449 = vpack.c.b16 %v436, %v435
        %v450 = vpack.c.b16 %v438, %v437
        %v451 = vpack.c.b16 %v440, %v439
        %v452 = vpack.c.b16 %v442, %v441
        %v453 = vpack.c.b16 %v444, %v443
        %v454 = vpack.c.b16 %v446, %v445
        %463 = vmatprep.subr.bf16.mxu0 0
        %464 = vmatpush1.bf16.msra.mxu0 %v447
        %465 = vmatprep.subr.bf16.mxu0 0
        %466 = vmatpush1.bf16.msra.mxu0 %v448
        %467 = vmatprep.subr.bf16.mxu0 0
        %468 = vmatpush1.bf16.msra.mxu0 %v449
        %469 = vmatprep.subr.bf16.mxu0 0
        %470 = vmatpush1.bf16.msra.mxu0 %v450
        %471 = vmatprep.subr.bf16.mxu0 0
        %472 = vmatpush1.bf16.msra.mxu0 %v451
        %473 = vmatprep.subr.bf16.mxu0 0
        %474 = vmatpush1.bf16.msra.mxu0 %v452
        %475 = vmatprep.subr.bf16.mxu0 0
        %476 = vmatpush1.bf16.msra.mxu0 %v453
        %477 = vmatprep.subr.bf16.mxu0 0
        %478 = vmatpush1.bf16.msra.mxu0 %v454
        %479 = vmatprep.subr.bf16.mxu0 0
        %480 = vmatpush1.bf16.msra.mxu0 0
        %481 = vmatprep.subr.bf16.mxu0 0
        %482 = vmatpush1.bf16.msra.mxu0 0
        %483 = vmatprep.subr.bf16.mxu0 0
        %484 = vmatpush1.bf16.msra.mxu0 0
        %485 = vmatprep.subr.bf16.mxu0 0
        %486 = vmatpush1.bf16.msra.mxu0 0
        %487 = vmatprep.subr.bf16.mxu0 0
        %488 = vmatpush1.bf16.msra.mxu0 0
        %489 = vmatprep.subr.bf16.mxu0 0
        %490 = vmatpush1.bf16.msra.mxu0 0
        %491 = vmatprep.subr.bf16.mxu0 0
        %492 = vmatpush1.bf16.msra.mxu0 0
        %493 = vmatprep.subr.bf16.mxu0 0
        %494 = vmatpush1.bf16.msra.mxu0 0
        %495 = vmatprep.mubr.bf16.mxu0 0
        %496 = vmatmul.mubr.bf16.gmra.mrb[0].mxu0 %v408
        %v497 = vpop.f32.mrb[0].mxu0
        %v498 = vadd.f32 %v413, %v497
        %v499 = vpop.f32.mrb[0].mxu0
        %v500 = vpop.f32.mrb[0].mxu0
        %v501 = vpop.f32.mrb[0].mxu0
        %502 = vdwg.mxu0
        %503 = vst [vmem:[%s268] sm:$0xff] %v498
        %s504 = sand.u32 %s141, 1
        %s505 = scalar_lea.sflag [#allocation4], %s504
        %s506 = sand.u32 %s141, 1
        %s507 = smul.addr %s506, 8
        %s508 = scalar_lea.vmem [#allocation8], %s507
        // Predicated region
        $region53: #{tpu_custom_call.1} parent=39 // pred_check
          %p509 = pneg %p151
        $region54: #{tpu_custom_call.1} parent=39 // pred_check_branch
          %511 = sbr.rel (%p509) target = $region56
        $region55: #{tpu_custom_call.1} parent=39 // pred_region
          %s513 = ssub.s32 128, 128
          %514 = vsyncadd %s505, %s513
          %s515 = smul.addr %s23, 128
          %s516 = scalar_lea.hbm %s5, %s515
          %s518 = sshll.u32 %s508, 4
          %s519 = int_to_ptr.vmem [resolvable:$true] %s518
          %521 = dma.vmem_to_hbm [thread:$0]  %s519, 128, %s516, %s505
        $region56: #{tpu_custom_call.1} parent=39 // pred_fallthru
          _
      $region40: #{tpu_custom_call.1} parent=5 // pred_fallthru
        _
      %p522 = scmp.le.s32.totalorder 2, %s18
      // Predicated region
      $region57: #{tpu_custom_call.1} parent=5 // pred_check
        %p523 = pneg %p522
      $region58: #{tpu_custom_call.1} parent=5 // pred_check_branch
        %525 = sbr.rel (%p523) target = $region60
      $region59: #{tpu_custom_call.1} parent=5 // pred_region
        %s526 = ssub.s32 %s18, 2
        // Predicated region
        $region61: #{tpu_custom_call.1} parent=59 // pred_check
          %p527 = pneg %p157
        $region62: #{tpu_custom_call.1} parent=59 // pred_check_branch
          %529 = sbr.rel (%p527) target = $region64
        $region63: #{tpu_custom_call.1} parent=59 // pred_region
          %s530 = sand.u32 %s142, 1
          %s531 = scalar_lea.sflag [#allocation4], %s530
          %s532 = sand.u32 %s142, 1
          %s533 = smul.addr %s532, 8
          %s534 = scalar_lea.vmem [#allocation8], %s533
          %535 = dma.done %s531, 128
        $region64: #{tpu_custom_call.1} parent=59 // pred_fallthru
          _
      $region60: #{tpu_custom_call.1} parent=5 // pred_fallthru
        _
    $region6: #{tpu_custom_call.1} parent=1 // loop_footer
      %s22 = sadd.s32 1, %s18
    $region7: #{tpu_custom_call.1} parent=1 // loop_footer_branch
      %17 = sbr.rel target = $region3
    $region8: #{tpu_custom_call.1} parent=1 // loop_exit
      _
    %536 = vsyncpa [#allocation3], 1
    %s537 = scalar_lea.sflag [#allocation3], 1
    %538 = vsyncpa %s537, 1
    %539 = vsyncpa [#allocation6], 1
    %540 = vsyncpa [#allocation4], 1
    %s541 = scalar_lea.sflag [#allocation4], 1
    %542 = vsyncpa %s541, 1

</llo_original>
